<compile_context>
chip_gen: v6e
topology: v6e:2x2x1
jax: 0.10.0
libtpu: 0.0.40
codegen_flags: <defaults>
</compile_context>

<pallas_src>
import functools

import jax
import jax.numpy as jnp
from jax.experimental import pallas as pl
from jax.experimental.pallas import tpu as pltpu


def _round_up(x, m):
    return (x + m - 1) // m * m


def _cdiv(a, b):
    return -(-a // b)


def _default_bf16_softmax():
    """bf16 exp only on chips with bf16-capable VPU/EUP (v6e / v7x)."""
    try:
        kind = jax.devices()[0].device_kind.lower()
    except Exception:
        return False
    return ("v6" in kind) or ("v7" in kind) or ("7x" in kind)


def _vmem_limit_bytes(TC, Hp, Lp, out_bytes):
    """Scoped-VMEM budget from the actual double-buffered block residency."""
    w = 2 * TC * Hp * 2          # candidate-weight tile, bf16, double-buffered
    xt = 2 * Hp * Lp * 2         # x^T block
    x = 2 * Lp * Hp * 2          # x block
    bias = 2 * Lp * 4            # mask bias block
    out = 2 * TC * Hp * out_bytes
    tmp = 2 * TC * Lp * 4        # scores + exp intermediates (conservative, f32)
    total = int((w + xt + x + bias + out + tmp) * 1.3) + (4 << 20)
    return int(max(16 << 20, min(total, 60 << 20)))


def fast_mla_kernel(w_ref, xt_ref, x_ref, bias_ref, o_ref, *, bf16_softmax):
    # w_ref:    (1, TC, Hp)  bf16   candidate-weight tile for this batch
    # xt_ref:   (1, Hp, Lp)  bf16   inputs transposed (attn_inputs)
    # x_ref:    (1, Lp, Hp)  bf16   inputs
    # bias_ref: (1, 1,  Lp)  f32    additive mask bias (0 keep / -1e30 masked)
    # o_ref:    (1, TC, Hp)  bf16
    w = w_ref[0]        # (TC, Hp)
    xt = xt_ref[0]      # (Hp, Lp)
    x = x_ref[0]        # (Lp, Hp)
    bias = bias_ref[0]  # (1, Lp)

    # scores[c, t] = sum_h w[c, h] * x[t, h]  — canonical (TC,Hp)@(Hp,Lp) MXU matmul.
    scores = jnp.dot(w, xt, preferred_element_type=jnp.float32)   # (TC, Lp) f32
    scores = scores + bias                                        # additive finite mask

    mx = jnp.max(scores, axis=-1, keepdims=True)                  # (TC, 1)
    centered = scores - mx
    if bf16_softmax:
        e = jnp.exp(centered.astype(jnp.bfloat16))                # (TC, Lp) bf16
        denom = jnp.sum(e.astype(jnp.float32), axis=-1, keepdims=True)
        e_mm = e
    else:
        e = jnp.exp(centered)                                     # (TC, Lp) f32
        denom = jnp.sum(e, axis=-1, keepdims=True)                # (TC, 1)
        e_mm = e.astype(x.dtype)

    # Unnormalized attention @ inputs, then scale by 1/denom (EUP reciprocal).
    out = jnp.dot(e_mm, x, preferred_element_type=jnp.float32)    # (TC, Hp) f32
    inv = pl.reciprocal(denom, approx=True)                       # (TC, 1)
    o_ref[0] = (out * inv).astype(o_ref.dtype)


def fast_ml_attention_core(inputs, masks, attn_weights, *, label_tile=512,
                           vmem_limit_bytes=None, bf16_softmax=None):
    """Core of FastMLAttention.forward.

    inputs:       (B, L, H) float
    masks:        (B, L) bool (True = keep)
    attn_weights: (B, C, H) float — per-batch candidate weight rows
                  (the result of `self.attention(candidates)` / `attn_weights(candidates)`).
    returns:      (B, C, H) in inputs.dtype
    """
    B, L, H = inputs.shape
    Bw, C, Hw = attn_weights.shape
    assert Bw == B and Hw == H, "attn_weights must be (B, C, H)"
    out_dtype = inputs.dtype
    if bf16_softmax is None:
        bf16_softmax = _default_bf16_softmax()

    # TPU-friendly padding: lane dims multiples of 128, candidate tile multiple of 8.
    Hp = _round_up(H, 128)
    Lp = _round_up(L, 128)
    # Adaptive candidate tile: bound padding waste (C=600 -> 2 tiles of 304, not 512+pad).
    Cp8 = _round_up(C, 8)
    tc_max = _round_up(max(8, min(label_tile, Cp8)), 8)
    n_tiles = _cdiv(Cp8, tc_max)
    TC = _round_up(_cdiv(Cp8, n_tiles), 8)
    Cp = TC * n_tiles

    # x in bf16, padded only if needed (skip extra HBM passes for aligned shapes).
    if (Lp != L) or (Hp != H):
        x16 = jnp.zeros((B, Lp, Hp), jnp.bfloat16).at[:, :L, :H].set(
            inputs.astype(jnp.bfloat16))
    else:
        x16 = inputs.astype(jnp.bfloat16)
    xt16 = jnp.swapaxes(x16, 1, 2)                      # (B, Hp, Lp) == inputs.transpose(1, 2)

    # Candidate weights in bf16, padded only if needed.
    if (Cp != C) or (Hp != H):
        w16 = jnp.zeros((B, Cp, Hp), jnp.bfloat16).at[:, :C, :H].set(
            attn_weights.astype(jnp.bfloat16))
    else:
        w16 = attn_weights.astype(jnp.bfloat16)

    # Additive mask bias; padded L positions are masked out.
    if Lp != L:
        mask_pad = jnp.zeros((B, Lp), jnp.bool_).at[:, :L].set(masks)
    else:
        mask_pad = masks
    bias = jnp.where(mask_pad, 0.0, -1e30).astype(jnp.float32).reshape(B, 1, Lp)

    out_bytes = 2  # bf16 kernel output
    if vmem_limit_bytes is None:
        vmem_limit_bytes = _vmem_limit_bytes(TC, Hp, Lp, out_bytes)

    kernel = functools.partial(fast_mla_kernel, bf16_softmax=bf16_softmax)
    n_ctiles = Cp // TC

    if B > 1:
        # batch OUTER, candidate-tile INNER: x / x^T / bias block indices constant
        # across the inner axis -> no re-DMA; w / out tiles stream.
        grid = (B, n_ctiles)
        in_specs = [
            pl.BlockSpec((1, TC, Hp), lambda b, c: (b, c, 0)),   # candidate weights
            pl.BlockSpec((1, Hp, Lp), lambda b, c: (b, 0, 0)),   # x^T   (revisited)
            pl.BlockSpec((1, Lp, Hp), lambda b, c: (b, 0, 0)),   # x     (revisited)
            pl.BlockSpec((1, 1, Lp), lambda b, c: (b, 0, 0)),    # bias  (revisited)
        ]
        out_specs = pl.BlockSpec((1, TC, Hp), lambda b, c: (b, c, 0))
        dim_sem = ("parallel", "parallel")
    else:
        # B == 1 (serving): 1-D grid over candidate tiles so megacore splits the
        # candidate axis and no core idles; x / x^T / bias indices are constant anyway.
        grid = (n_ctiles,)
        in_specs = [
            pl.BlockSpec((1, TC, Hp), lambda c: (0, c, 0)),
            pl.BlockSpec((1, Hp, Lp), lambda c: (0, 0, 0)),
            pl.BlockSpec((1, Lp, Hp), lambda c: (0, 0, 0)),
            pl.BlockSpec((1, 1, Lp), lambda c: (0, 0, 0)),
        ]
        out_specs = pl.BlockSpec((1, TC, Hp), lambda c: (0, c, 0))
        dim_sem = ("parallel",)

    out = pl.pallas_call(
        kernel,
        out_shape=jax.ShapeDtypeStruct((B, Cp, Hp), jnp.bfloat16),
        grid_spec=pltpu.PrefetchScalarGridSpec(
            num_scalar_prefetch=0,
            grid=grid,
            in_specs=in_specs,
            out_specs=out_specs,
        ),
        compiler_params=pltpu.CompilerParams(
            dimension_semantics=dim_sem,
            vmem_limit_bytes=vmem_limit_bytes,
        ),
    )(w16, xt16, x16, bias)

    if (Cp != C) or (Hp != H):
        out = out[:, :C, :H]
    return out.astype(out_dtype)


def fast_ml_attention(inputs, masks, candidates, emb_weight, *, label_tile=512,
                      vmem_limit_bytes=None, bf16_softmax=None):
    """FastMLAttention.forward with parallel_attn=True (nn.Embedding candidate lookup).

    candidates: (B, C) int32 label ids, emb_weight: (labels_num + 1, H).
    """
    # TODO(synk): the candidate-embedding lookup (`self.attention(candidates)` — or an
    # arbitrary external nn.Module) is a row gather done here in plain JAX, not inside
    # the Pallas kernel (non-contiguous per-batch row indices are not BlockSpec-expressible).
    # Gather directly in bf16 so the gather + cast is a single HBM pass.
    attn_weights = jnp.take(emb_weight.astype(jnp.bfloat16), candidates, axis=0)   # (B, C, H)
    return fast_ml_attention_core(inputs, masks, attn_weights,
                                  label_tile=label_tile,
                                  vmem_limit_bytes=vmem_limit_bytes,
                                  bf16_softmax=bf16_softmax)


def fast_ml_attention_ref(inputs, masks, attn_weights):
    """Pure-JAX reference matching the PyTorch module (f32 math)."""
    scores = jnp.einsum("bch,blh->bcl", attn_weights.astype(jnp.float32),
                        inputs.astype(jnp.float32))
    scores = jnp.where(masks[:, None, :], scores, -jnp.inf)
    attn = jax.nn.softmax(scores, axis=-1)
    return jnp.einsum("bcl,blh->bch", attn, inputs.astype(jnp.float32))


if __name__ == "__main__":
    B, L, H = 2, 8, 32
    labels_num, C = 64, 16   # 16 candidate labels per example

    key = jax.random.PRNGKey(0)
    k_x, k_w, k_c = jax.random.split(key, 3)

    inputs = jax.random.normal(k_x, (B, L, H), dtype=jnp.float32)

    # nn.Embedding(labels_num + 1, H) with xavier_uniform_ init.
    bound = (6.0 / (labels_num + 1 + H)) ** 0.5
    emb_weight = jax.random.uniform(
        k_w, (labels_num + 1, H), minval=-bound, maxval=bound, dtype=jnp.float32)

    candidates = jax.random.randint(k_c, (B, C), 0, labels_num + 1, dtype=jnp.int32)

    # Each batch element has a valid prefix (so no row is fully masked).
    lengths = jnp.array([L, L - 3], dtype=jnp.int32)
    masks = jnp.arange(L)[None, :] < lengths[:, None]   # (B, L) bool

    gathered = jnp.take(emb_weight, candidates, axis=0)

    # 1) label_tile=8 exercises the 2-D (batch, candidate-tile) grid at toy sizes.
    out = fast_ml_attention(inputs, masks, candidates, emb_weight, label_tile=8)
    out = jax.block_until_ready(out)
    ref = fast_ml_attention_ref(inputs, masks, gathered)
    assert out.shape == (B, C, H)
    max_err = float(jnp.max(jnp.abs(out - ref)))
    # Tolerance accounts for bf16 MXU matmuls, bf16 output, EUP approx reciprocal.
    assert jnp.allclose(out, ref, atol=5e-2, rtol=5e-2), \
        f"mismatch vs reference (B=2 path), max abs err={max_err}"

    # 2) B == 1 exercises the 1-D candidate-tile grid (serving / megacore path).
    out1 = fast_ml_attention(inputs[:1], masks[:1], candidates[:1], emb_weight,
                             label_tile=8)
    out1 = jax.block_until_ready(out1)
    ref1 = fast_ml_attention_ref(inputs[:1], masks[:1], gathered[:1])
    max_err1 = float(jnp.max(jnp.abs(out1 - ref1)))
    assert jnp.allclose(out1, ref1, atol=5e-2, rtol=5e-2), \
        f"mismatch vs reference (B=1 path), max abs err={max_err1}"

    print("KERNEL_OK")
</pallas_src>

<mosaic_0001>
module attributes {stable_mosaic.version = 11 : i64} {
  func.func @fast_mla_kernel(%arg0: i32, %arg1: i32, %arg2: memref<1x8x128xbf16, #tpu.memory_space<vmem>>, %arg3: memref<1x128x128xbf16, #tpu.memory_space<vmem>>, %arg4: memref<1x128x128xbf16, #tpu.memory_space<vmem>>, %arg5: memref<1x1x128xf32, #tpu.memory_space<vmem>>, %arg6: memref<1x8x128xbf16, #tpu.memory_space<vmem>>) attributes {dimension_semantics = [#tpu.dimension_semantics<parallel>, #tpu.dimension_semantics<parallel>], iteration_bounds = array<i64: 2, 2>, scalar_prefetch = 0 : i64, scratch_operands = 0 : i64, tpu.core_type = #tpu.core_type<tc>, window_params = [{transform_indices = @transform_0, window_bounds = array<i64: 1, 8, 128>}, {transform_indices = @transform_1, window_bounds = array<i64: 1, 128, 128>}, {transform_indices = @transform_2, window_bounds = array<i64: 1, 128, 128>}, {transform_indices = @transform_3, window_bounds = array<i64: 1, 1, 128>}, {transform_indices = @transform_4, window_bounds = array<i64: 1, 8, 128>}]} {
    %c0 = arith.constant 0 : index
    %c0_0 = arith.constant 0 : index
    %c0_1 = arith.constant 0 : index
    %0 = vector.load %arg2[%c0, %c0_0, %c0_1] : memref<1x8x128xbf16, #tpu.memory_space<vmem>>, vector<1x8x128xbf16>
    %1 = vector.shape_cast %0 : vector<1x8x128xbf16> to vector<8x128xbf16>
    %c0_2 = arith.constant 0 : index
    %c0_3 = arith.constant 0 : index
    %c0_4 = arith.constant 0 : index
    %2 = vector.load %arg3[%c0_2, %c0_3, %c0_4] : memref<1x128x128xbf16, #tpu.memory_space<vmem>>, vector<1x128x128xbf16>
    %3 = vector.shape_cast %2 : vector<1x128x128xbf16> to vector<128x128xbf16>
    %c0_5 = arith.constant 0 : index
    %c0_6 = arith.constant 0 : index
    %c0_7 = arith.constant 0 : index
    %4 = vector.load %arg4[%c0_5, %c0_6, %c0_7] : memref<1x128x128xbf16, #tpu.memory_space<vmem>>, vector<1x128x128xbf16>
    %5 = vector.shape_cast %4 : vector<1x128x128xbf16> to vector<128x128xbf16>
    %c0_8 = arith.constant 0 : index
    %c0_9 = arith.constant 0 : index
    %c0_10 = arith.constant 0 : index
    %6 = vector.load %arg5[%c0_8, %c0_9, %c0_10] : memref<1x1x128xf32, #tpu.memory_space<vmem>>, vector<1x1x128xf32>
    %7 = vector.shape_cast %6 : vector<1x1x128xf32> to vector<1x128xf32>
    %cst = arith.constant dense<0.000000e+00> : vector<8x128xf32>
    %8 = tpu.matmul %1, %3, %cst {dimension_numbers = #tpu.dot_dimension_numbers<[1], [0], [0], [1], [0, 0, 1, 1], [], []>} : vector<8x128xbf16>, vector<128x128xbf16>, vector<8x128xf32> -> vector<8x128xf32>
    %9 = vector.broadcast %7 : vector<1x128xf32> to vector<8x128xf32>
    %10 = arith.addf %8, %9 : vector<8x128xf32>
    %cst_11 = arith.constant dense<0xFF800000> : vector<8xf32>
    %11 = vector.multi_reduction <maximumf>, %10, %cst_11 [1] : vector<8x128xf32> to vector<8xf32>
    %12 = vector.shape_cast %11 : vector<8xf32> to vector<8x1xf32>
    %13 = vector.broadcast %12 : vector<8x1xf32> to vector<8x128xf32>
    %14 = arith.subf %10, %13 : vector<8x128xf32>
    %15 = math.exp %14 : vector<8x128xf32>
    %cst_12 = arith.constant dense<0.000000e+00> : vector<8xf32>
    %16 = vector.multi_reduction <add>, %15, %cst_12 [1] : vector<8x128xf32> to vector<8xf32>
    %17 = vector.shape_cast %16 : vector<8xf32> to vector<8x1xf32>
    %18 = arith.truncf %15 : vector<8x128xf32> to vector<8x128xbf16>
    %cst_13 = arith.constant dense<0.000000e+00> : vector<8x128xf32>
    %19 = tpu.matmul %18, %5, %cst_13 {dimension_numbers = #tpu.dot_dimension_numbers<[1], [0], [0], [1], [0, 0, 1, 1], [], []>} : vector<8x128xbf16>, vector<128x128xbf16>, vector<8x128xf32> -> vector<8x128xf32>
    %20 = tpu.reciprocal %17 {approx = true} : vector<8x1xf32> -> vector<8x1xf32>
    %21 = vector.broadcast %20 : vector<8x1xf32> to vector<8x128xf32>
    %22 = arith.mulf %19, %21 : vector<8x128xf32>
    %23 = arith.truncf %22 : vector<8x128xf32> to vector<8x128xbf16>
    %c0_14 = arith.constant 0 : index
    %c0_15 = arith.constant 0 : index
    %c0_16 = arith.constant 0 : index
    %24 = vector.load %arg6[%c0_14, %c0_15, %c0_16] : memref<1x8x128xbf16, #tpu.memory_space<vmem>>, vector<1x8x128xbf16>
    %25 = vector.shape_cast %24 : vector<1x8x128xbf16> to vector<8x128xbf16>
    %26 = vector.shape_cast %23 : vector<8x128xbf16> to vector<1x8x128xbf16>
    tpu.vector_store %arg6[%c0_14, %c0_15, %c0_16], %26 {strides = array<i32>} : memref<1x8x128xbf16, #tpu.memory_space<vmem>>, vector<1x8x128xbf16>,
    return
  }
  func.func @transform_0(%arg0: i32, %arg1: i32) -> (i32, i32, i32) {
    %c0_i32 = arith.constant 0 : i32
    %c0_i32_0 = arith.constant 0 : i32
    return %arg0, %arg1, %c0_i32 : i32, i32, i32
  }
  func.func @transform_1(%arg0: i32, %arg1: i32) -> (i32, i32, i32) {
    %c0_i32 = arith.constant 0 : i32
    %c0_i32_0 = arith.constant 0 : i32
    %c0_i32_1 = arith.constant 0 : i32
    return %arg0, %c0_i32, %c0_i32_0 : i32, i32, i32
  }
  func.func @transform_2(%arg0: i32, %arg1: i32) -> (i32, i32, i32) {
    %c0_i32 = arith.constant 0 : i32
    %c0_i32_0 = arith.constant 0 : i32
    %c0_i32_1 = arith.constant 0 : i32
    return %arg0, %c0_i32, %c0_i32_0 : i32, i32, i32
  }
  func.func @transform_3(%arg0: i32, %arg1: i32) -> (i32, i32, i32) {
    %c0_i32 = arith.constant 0 : i32
    %c0_i32_0 = arith.constant 0 : i32
    %c0_i32_1 = arith.constant 0 : i32
    return %arg0, %c0_i32, %c0_i32_0 : i32, i32, i32
  }
  func.func @transform_4(%arg0: i32, %arg1: i32) -> (i32, i32, i32) {
    %c0_i32 = arith.constant 0 : i32
    %c0_i32_0 = arith.constant 0 : i32
    return %arg0, %arg1, %c0_i32 : i32, i32, i32
  }
}

</mosaic_0001>

<llo_original>
// kernel: tpu_custom_call.1
$region0: #{tpu_custom_call.1}
  #allocation0 [shape = 'u32[]', space=smem, size = 0x4, offset = 0x4, fixed_abs, tag = 'smem constant byte address 0x4 - core index']
  #allocation1 [shape = 'u32[144,128]{1,0:T(1,128)}', space=vmem, size = 0x12000, scoped, tag = 'internal scratch']
  %s0 = inlined_call_operand.hbm [shape: bf16[2,16,128], index: 0, kind: input, shape index: {}]
  %s1 = inlined_call_operand.hbm [shape: bf16[2,128,128], index: 1, kind: input, shape index: {}]
  %s2 = inlined_call_operand.hbm [shape: bf16[2,128,128], index: 2, kind: input, shape index: {}]
  %s3 = inlined_call_operand.vmem [shape: f32[2,1,128], index: 3, kind: input, shape index: {}]
  %s4 = inlined_call_operand.hbm [shape: bf16[2,16,128], index: 4, kind: output, shape index: {}]
  %s5 = sld [smem:[#allocation0]]
  $region61: #{tpu_custom_call.1} parent=0
    _
  %s7 = ssub.s32 1, %s5
  %s8 = scalar_select 0, %s7, %s5
  $region1: #{tpu_custom_call.1} parent=0
    #allocation2 [shape = 'u8[4096]{0}', space=vmem, size = 0x1000, scoped, tag = 'input window, operand 0']
    #allocation3 [shape = 's32[2]{0}', space=sflag, size = 0x8, scoped, tag = 'scoped memory for tpu_custom_call.1']
    #allocation4 [shape = 's32[2]{0}', space=sflag, size = 0x8, scoped, tag = 'scoped memory for tpu_custom_call.1']
    #allocation5 [shape = 'u8[65536]{0}', space=vmem, size = 0x10000, scoped, tag = 'input window, operand 1']
    #allocation6 [shape = 's32[2]{0}', space=sflag, size = 0x8, scoped, tag = 'scoped memory for tpu_custom_call.1']
    #allocation7 [shape = 'u8[65536]{0}', space=vmem, size = 0x10000, scoped, tag = 'input window, operand 2']
    #allocation8 [shape = 'u8[4096]{0}', space=vmem, size = 0x1000, scoped, tag = 'output window, operand 0']
    %9 = vsyncpa [#allocation3], 0
    %s10 = scalar_lea.sflag [#allocation3], 1
    %11 = vsyncpa %s10, 0
    %12 = vsyncpa [#allocation6], 0
    %s13 = scalar_lea.sflag [#allocation6], 1
    %14 = vsyncpa %s13, 0
    %15 = vsyncpa [#allocation4], 0
    %s16 = scalar_lea.sflag [#allocation4], 1
    %17 = vsyncpa %s16, 0
    loop: start=0, step=1, limit=6
    $region2: #{tpu_custom_call.1} parent=1 // loop_pre_header
      _
    $region3: #{tpu_custom_call.1} parent=1 // loop_header
      %s19 = sphi 0, %s23
      %p20 = scmp.ge.s32.totalorder %s19, 6
      %s26 = sphi 0, %s38
      %s27 = sphi 0, %s34
      %s28 = sphi 0, %s26
      %s29 = sphi 0, %s27
      %s30 = sphi 0, %s28
      %s31 = sphi 0, %s29
      %s43 = sphi 0, %s45
      %s46 = sphi 0, %s43
      %s47 = sphi 0, %s46
      %s63 = sphi 0, %s47
      %s69 = sphi 0, %s71
      %s72 = sphi 0, %s69
      %s73 = sphi 0, %s72
      %s89 = sphi 0, %s73
      %s95 = sphi 0, %s97
      %s98 = sphi 0, %s95
      %s99 = sphi 0, %s98
      %s115 = sphi 0, %s99
      %s121 = sphi 0, %s123
      %s124 = sphi 0, %s121
      %s125 = sphi 0, %s124
      %s141 = sphi 0, %s125
      %s149 = sphi 0, %s151
      %s152 = sphi 0, %s149
      %s153 = sphi 0, %s152
      %s169 = sphi 0, %s153
    $region4: #{tpu_custom_call.1} parent=1 // loop_header_branch
      %22 = sbr.rel (%p20) target = $region8
    $region5: #{tpu_custom_call.1} parent=1 // loop_body
      %s24 = ssub.s32 %s19, 1
      %s25 = ssub.s32 %s19, 2
      %s32 = sadd.s32 1, %s27
      %p33 = scmp.ge.s32.totalorder %s32, 2
      %s34 = scalar_select %p33, 0, %s32
      %s35 = sadd.s32 1, %s26
      %s36 = scalar_select %p33, %s35, %s26
      %p37 = scmp.ge.s32.totalorder %s36, 2
      %s38 = scalar_select %p37, 0, %s36
      %s39 = ssub.s32 %s26, %s38
      %s40 = ssub.s32 %s27, %s34
      %s41 = sor.u32 %s39, %s40
      %p42 = scmp.eq.s32.totalorder %s41, 0
      %s44 = sadd.s32 %s43, 1
      %s45 = scalar_select %p42, %s43, %s44
      %p48 = pneg %p42
      %p49 = scmp.eq.s32.totalorder %s19, 3
      %p50 = por %p48, %p49
      %p51 = scmp.ne.s32.totalorder %s43, %s46
      %p52 = scmp.eq.s32.totalorder %s19, 0
      %p53 = por %p51, %p52
      %p54 = scmp.ne.s32.totalorder %s43, %s46
      %p55 = scmp.eq.s32.totalorder %s24, 3
      %p56 = por %p54, %p55
      %p57 = scmp.ne.s32.totalorder %s46, %s47
      %p58 = scmp.eq.s32.totalorder %s24, 0
      %p59 = por %p57, %p58
      %p60 = scmp.ne.s32.totalorder %s46, %s47
      %p61 = scmp.eq.s32.totalorder %s25, 3
      %p62 = por %p60, %p61
      %p64 = scmp.ne.s32.totalorder %s47, %s63
      %p65 = scmp.eq.s32.totalorder %s25, 0
      %p66 = por %p64, %p65
      %s67 = ssub.s32 %s26, %s38
      %p68 = scmp.eq.s32.totalorder %s67, 0
      %s70 = sadd.s32 %s69, 1
      %s71 = scalar_select %p68, %s69, %s70
      %p74 = pneg %p68
      %p75 = scmp.eq.s32.totalorder %s19, 3
      %p76 = por %p74, %p75
      %p77 = scmp.ne.s32.totalorder %s69, %s72
      %p78 = scmp.eq.s32.totalorder %s19, 0
      %p79 = por %p77, %p78
      %p80 = scmp.ne.s32.totalorder %s69, %s72
      %p81 = scmp.eq.s32.totalorder %s24, 3
      %p82 = por %p80, %p81
      %p83 = scmp.ne.s32.totalorder %s72, %s73
      %p84 = scmp.eq.s32.totalorder %s24, 0
      %p85 = por %p83, %p84
      %p86 = scmp.ne.s32.totalorder %s72, %s73
      %p87 = scmp.eq.s32.totalorder %s25, 3
      %p88 = por %p86, %p87
      %p90 = scmp.ne.s32.totalorder %s73, %s89
      %p91 = scmp.eq.s32.totalorder %s25, 0
      %p92 = por %p90, %p91
      %s93 = ssub.s32 %s26, %s38
      %p94 = scmp.eq.s32.totalorder %s93, 0
      %s96 = sadd.s32 %s95, 1
      %s97 = scalar_select %p94, %s95, %s96
      %p100 = pneg %p94
      %p101 = scmp.eq.s32.totalorder %s19, 3
      %p102 = por %p100, %p101
      %p103 = scmp.ne.s32.totalorder %s95, %s98
      %p104 = scmp.eq.s32.totalorder %s19, 0
      %p105 = por %p103, %p104
      %p106 = scmp.ne.s32.totalorder %s95, %s98
      %p107 = scmp.eq.s32.totalorder %s24, 3
      %p108 = por %p106, %p107
      %p109 = scmp.ne.s32.totalorder %s98, %s99
      %p110 = scmp.eq.s32.totalorder %s24, 0
      %p111 = por %p109, %p110
      %p112 = scmp.ne.s32.totalorder %s98, %s99
      %p113 = scmp.eq.s32.totalorder %s25, 3
      %p114 = por %p112, %p113
      %p116 = scmp.ne.s32.totalorder %s99, %s115
      %p117 = scmp.eq.s32.totalorder %s25, 0
      %p118 = por %p116, %p117
      %s119 = ssub.s32 %s26, %s38
      %p120 = scmp.eq.s32.totalorder %s119, 0
      %s122 = sadd.s32 %s121, 1
      %s123 = scalar_select %p120, %s121, %s122
      %p126 = pneg %p120
      %p127 = scmp.eq.s32.totalorder %s19, 3
      %p128 = por %p126, %p127
      %p129 = scmp.ne.s32.totalorder %s121, %s124
      %p130 = scmp.eq.s32.totalorder %s19, 0
      %p131 = por %p129, %p130
      %p132 = scmp.ne.s32.totalorder %s121, %s124
      %p133 = scmp.eq.s32.totalorder %s24, 3
      %p134 = por %p132, %p133
      %p135 = scmp.ne.s32.totalorder %s124, %s125
      %p136 = scmp.eq.s32.totalorder %s24, 0
      %p137 = por %p135, %p136
      %p138 = scmp.ne.s32.totalorder %s124, %s125
      %p139 = scmp.eq.s32.totalorder %s25, 3
      %p140 = por %p138, %p139
      %p142 = scmp.ne.s32.totalorder %s125, %s141
      %p143 = scmp.eq.s32.totalorder %s25, 0
      %p144 = por %p142, %p143
      %s145 = ssub.s32 %s26, %s38
      %s146 = ssub.s32 %s27, %s34
      %s147 = sor.u32 %s145, %s146
      %p148 = scmp.eq.s32.totalorder %s147, 0
      %s150 = sadd.s32 %s149, 1
      %s151 = scalar_select %p148, %s149, %s150
      %p154 = pneg %p148
      %p155 = scmp.eq.s32.totalorder %s19, 3
      %p156 = por %p154, %p155
      %p157 = scmp.ne.s32.totalorder %s149, %s152
      %p158 = scmp.eq.s32.totalorder %s19, 0
      %p159 = por %p157, %p158
      %p160 = scmp.ne.s32.totalorder %s149, %s152
      %p161 = scmp.eq.s32.totalorder %s24, 3
      %p162 = por %p160, %p161
      %p163 = scmp.ne.s32.totalorder %s152, %s153
      %p164 = scmp.eq.s32.totalorder %s24, 0
      %p165 = por %p163, %p164
      %p166 = scmp.ne.s32.totalorder %s152, %s153
      %p167 = scmp.eq.s32.totalorder %s25, 3
      %p168 = por %p166, %p167
      %p170 = scmp.ne.s32.totalorder %s153, %s169
      %p171 = scmp.eq.s32.totalorder %s25, 0
      %p172 = por %p170, %p171
      %p173 = scmp.le.s32.totalorder 1, %s19
      %p174 = scmp.lt.s32.totalorder %s19, 5
      %p175 = pnand %p173, %p174
      %p176 = pneg %p175
      // Predicated region
      $region9: #{tpu_custom_call.1} parent=5 // pred_check
        _
      $region10: #{tpu_custom_call.1} parent=5 // pred_check_branch
        %178 = sbr.rel (%p175) target = $region12
      $region11: #{tpu_custom_call.1} parent=5 // pred_region
        %s179 = ssub.s32 %s19, 1
      $region12: #{tpu_custom_call.1} parent=5 // pred_fallthru
        _
      %p180 = scmp.lt.s32.totalorder %s19, 4
      // Predicated region
      $region13: #{tpu_custom_call.1} parent=5 // pred_check
        %p181 = pneg %p180
      $region14: #{tpu_custom_call.1} parent=5 // pred_check_branch
        %183 = sbr.rel (%p181) target = $region16
      $region15: #{tpu_custom_call.1} parent=5 // pred_region
        // Predicated region
        $region17: #{tpu_custom_call.1} parent=15 // pred_check
          %p184 = pneg %p53
        $region18: #{tpu_custom_call.1} parent=15 // pred_check_branch
          %186 = sbr.rel (%p184) target = $region20
        $region19: #{tpu_custom_call.1} parent=15 // pred_region
          %s187 = sand.u32 %s43, 1
          %s188 = scalar_lea.sflag [#allocation3], %s187
          %s189 = sand.u32 %s43, 1
          %s190 = smul.addr %s189, 4
          %s191 = scalar_lea.vmem [#allocation2], %s190
          %s193 = ssub.s32 64, 64
          %194 = vsyncadd %s188, %s193
          %s195 = smul.addr %s26, 2
          %s196 = sadd.s32 %s27, %s195
          %s197 = smul.addr %s196, 64
          %s198 = scalar_lea.hbm %s0, %s197
          %s200 = sshll.u32 %s191, 4
          %s201 = int_to_ptr.vmem [resolvable:$true] %s200
          %203 = dma.hbm_to_vmem [thread:$0]  %s198, 64, %s201, %s188
        $region20: #{tpu_custom_call.1} parent=15 // pred_fallthru
          _
        // Predicated region
        $region21: #{tpu_custom_call.1} parent=15 // pred_check
          %p204 = pneg %p79
        $region22: #{tpu_custom_call.1} parent=15 // pred_check_branch
          %206 = sbr.rel (%p204) target = $region24
        $region23: #{tpu_custom_call.1} parent=15 // pred_region
          %s207 = sand.u32 %s19, 1
          %s208 = scalar_lea.sflag [#allocation6], %s207
          %s209 = sand.u32 %s69, 1
          %s210 = smul.addr %s209, 64
          %s211 = scalar_lea.vmem [#allocation5], %s210
          %s213 = ssub.s32 1024, 1024
          %214 = vsyncadd %s208, %s213
          %s215 = smul.addr %s26, 16
          %s216 = smul.addr %s215, 64
          %s217 = scalar_lea.hbm %s1, %s216
          %s218 = sshll.u32 %s211, 4
          %s219 = int_to_ptr.vmem [resolvable:$true] %s218
          %224 = dma.hbm_to_vmem [thread:$0]  %s217, 1024, %s219, %s208, 64, 64, 4
        $region24: #{tpu_custom_call.1} parent=15 // pred_fallthru
          _
        // Predicated region
        $region25: #{tpu_custom_call.1} parent=15 // pred_check
          %p225 = pneg %p105
        $region26: #{tpu_custom_call.1} parent=15 // pred_check_branch
          %227 = sbr.rel (%p225) target = $region28
        $region27: #{tpu_custom_call.1} parent=15 // pred_region
          %s228 = sand.u32 %s19, 1
          %s229 = scalar_lea.sflag [#allocation6], %s228
          %s230 = sand.u32 %s95, 1
          %s231 = smul.addr %s230, 64
          %s232 = scalar_lea.vmem [#allocation7], %s231
          %s234 = ssub.s32 1024, 1024
          %235 = vsyncadd %s229, %s234
          %s236 = smul.addr %s26, 16
          %s237 = smul.addr %s236, 64
          %s238 = scalar_lea.hbm %s2, %s237
          %s239 = sshll.u32 %s232, 4
          %s240 = int_to_ptr.vmem [resolvable:$true] %s239
          %245 = dma.hbm_to_vmem [thread:$0]  %s238, 1024, %s240, %s229, 64, 64, 4
        $region28: #{tpu_custom_call.1} parent=15 // pred_fallthru
          _
        // Predicated region
        $region29: #{tpu_custom_call.1} parent=15 // pred_check
          %p246 = pneg %p131
        $region30: #{tpu_custom_call.1} parent=15 // pred_check_branch
          %248 = sbr.rel (%p246) target = $region32
        $region31: #{tpu_custom_call.1} parent=15 // pred_region
          %p249 = scmp.lt.s32.totalorder %s26, 1
          %s250 = scalar_select %p249, %s26, 1
          %s251 = scalar_lea.vmem %s3, %s250
        $region32: #{tpu_custom_call.1} parent=15 // pred_fallthru
          _
      $region16: #{tpu_custom_call.1} parent=5 // pred_fallthru
        _
      %p252 = scmp.le.s32.totalorder 1, %s19
      %p253 = scmp.lt.s32.totalorder %s19, 5
      %p254 = pnand %p252, %p253
      %p255 = pneg %p254
      // Predicated region
      $region33: #{tpu_custom_call.1} parent=5 // pred_check
        _
      $region34: #{tpu_custom_call.1} parent=5 // pred_check_branch
        %257 = sbr.rel (%p254) target = $region36
      $region35: #{tpu_custom_call.1} parent=5 // pred_region
        %s258 = ssub.s32 %s19, 1
        %s259 = sand.u32 %s46, 1
        %s260 = scalar_lea.sflag [#allocation3], %s259
        %s261 = sand.u32 %s46, 1
        %s262 = smul.addr %s261, 4
        %s263 = scalar_lea.vmem [#allocation2], %s262
        // Predicated region
        $region37: #{tpu_custom_call.1} parent=35 // pred_check
          %p264 = pneg %p59
        $region38: #{tpu_custom_call.1} parent=35 // pred_check_branch
          %266 = sbr.rel (%p264) target = $region40
        $region39: #{tpu_custom_call.1} parent=35 // pred_region
          %267 = dma.done %s260, 64
        $region40: #{tpu_custom_call.1} parent=35 // pred_fallthru
          _
        %s268 = sand.u32 %s24, 1
        %s269 = scalar_lea.sflag [#allocation6], %s268
        %s270 = sand.u32 %s72, 1
        %s271 = smul.addr %s270, 64
        %s272 = scalar_lea.vmem [#allocation5], %s271
        // Predicated region
        $region41: #{tpu_custom_call.1} parent=35 // pred_check
          %p273 = pneg %p85
        $region42: #{tpu_custom_call.1} parent=35 // pred_check_branch
          %275 = sbr.rel (%p273) target = $region44
        $region43: #{tpu_custom_call.1} parent=35 // pred_region
          %276 = dma.done %s269, 1024
        $region44: #{tpu_custom_call.1} parent=35 // pred_fallthru
          _
        %s277 = sand.u32 %s24, 1
        %s278 = scalar_lea.sflag [#allocation6], %s277
        %s279 = sand.u32 %s98, 1
        %s280 = smul.addr %s279, 64
        %s281 = scalar_lea.vmem [#allocation7], %s280
        // Predicated region
        $region45: #{tpu_custom_call.1} parent=35 // pred_check
          %p282 = pneg %p111
        $region46: #{tpu_custom_call.1} parent=35 // pred_check_branch
          %284 = sbr.rel (%p282) target = $region48
        $region47: #{tpu_custom_call.1} parent=35 // pred_region
          %285 = dma.done %s278, 1024
        $region48: #{tpu_custom_call.1} parent=35 // pred_fallthru
          _
        %s286 = sand.u32 %s46, 1
        %s287 = scalar_lea.sflag [#allocation3], %s286
        %s288 = sand.u32 %s46, 1
        %s289 = smul.addr %s288, 4
        %s290 = scalar_lea.vmem [#allocation2], %s289
        %p291 = pneg %p59
        %p292 = pneg %p56
        %s293 = sand.u32 %s24, 1
        %s294 = scalar_lea.sflag [#allocation6], %s293
        %s295 = sand.u32 %s72, 1
        %s296 = smul.addr %s295, 64
        %s297 = scalar_lea.vmem [#allocation5], %s296
        %p298 = pneg %p85
        %p299 = pneg %p82
        %s300 = sand.u32 %s24, 1
        %s301 = scalar_lea.sflag [#allocation6], %s300
        %s302 = sand.u32 %s98, 1
        %s303 = smul.addr %s302, 64
        %s304 = scalar_lea.vmem [#allocation7], %s303
        %p305 = pneg %p111
        %p306 = pneg %p108
        %p307 = scmp.lt.s32.totalorder %s28, 1
        %s308 = scalar_select %p307, %s28, 1
        %s309 = scalar_lea.vmem %s3, %s308
        %p310 = pneg %p137
        %p311 = pneg %p134
        %p312 = pneg %p165
        %p313 = pneg %p162
        %s314 = sand.u32 %s152, 1
        %s315 = scalar_lea.sflag [#allocation4], %s314
        %s316 = sand.u32 %s152, 1
        %s317 = smul.addr %s316, 4
        %s318 = scalar_lea.vmem [#allocation8], %s317
        %p319 = scmp.lt.s32.totalorder %s28, 1
        %s320 = scalar_select %p319, %s28, 1
        %s321 = scalar_lea.vmem %s3, %s320
        %v323 = vld [vmem:[%s263] sm:$0xf]
        %v324 = vld [vmem:[%s272] sm:$0xf]
        %v325 = vld [vmem:[%s272 + $0x4] sm:$0xf]
        %v326 = vld [vmem:[%s272 + $0x8] sm:$0xf]
        %v327 = vld [vmem:[%s272 + $0xc] sm:$0xf]
        %v328 = vld [vmem:[%s272 + $0x10] sm:$0xf]
        %v329 = vld [vmem:[%s272 + $0x14] sm:$0xf]
        %v330 = vld [vmem:[%s272 + $0x18] sm:$0xf]
        %v331 = vld [vmem:[%s272 + $0x1c] sm:$0xf]
        %v332 = vld [vmem:[%s272 + $0x20] sm:$0xf]
        %v333 = vld [vmem:[%s272 + $0x24] sm:$0xf]
        %v334 = vld [vmem:[%s272 + $0x28] sm:$0xf]
        %v335 = vld [vmem:[%s272 + $0x2c] sm:$0xf]
        %v336 = vld [vmem:[%s272 + $0x30] sm:$0xf]
        %v337 = vld [vmem:[%s272 + $0x34] sm:$0xf]
        %v338 = vld [vmem:[%s272 + $0x38] sm:$0xf]
        %v339 = vld [vmem:[%s272 + $0x3c] sm:$0xf]
        %v340 = vld [vmem:[%s281] sm:$0xf]
        %v341 = vld [vmem:[%s281 + $0x4] sm:$0xf]
        %v342 = vld [vmem:[%s281 + $0x8] sm:$0xf]
        %v343 = vld [vmem:[%s281 + $0xc] sm:$0xf]
        %v344 = vld [vmem:[%s281 + $0x10] sm:$0xf]
        %v345 = vld [vmem:[%s281 + $0x14] sm:$0xf]
        %v346 = vld [vmem:[%s281 + $0x18] sm:$0xf]
        %v347 = vld [vmem:[%s281 + $0x1c] sm:$0xf]
        %v348 = vld [vmem:[%s281 + $0x20] sm:$0xf]
        %v349 = vld [vmem:[%s281 + $0x24] sm:$0xf]
        %v350 = vld [vmem:[%s281 + $0x28] sm:$0xf]
        %v351 = vld [vmem:[%s281 + $0x2c] sm:$0xf]
        %v352 = vld [vmem:[%s281 + $0x30] sm:$0xf]
        %v353 = vld [vmem:[%s281 + $0x34] sm:$0xf]
        %v354 = vld [vmem:[%s281 + $0x38] sm:$0xf]
        %v355 = vld [vmem:[%s281 + $0x3c] sm:$0xf]
        %v356 = vld [vmem:[%s321] sm:$0x1]
        %v358 = vlaneseq
        %v359 = vshrl.u32 %v358, 7
        %v360 = vsub.s32 0, %v359
        %v361 = vrot.slane %v356, %v360
        %v379 = vunpack.c.l.b16 %v324
        %v380 = vunpack.c.l.b16 %v325
        %v381 = vunpack.c.l.b16 %v326
        %v382 = vunpack.c.l.b16 %v327
        %v383 = vunpack.c.l.b16 %v328
        %v384 = vunpack.c.l.b16 %v329
        %v385 = vunpack.c.l.b16 %v330
        %v386 = vunpack.c.l.b16 %v331
        %v387 = vunpack.c.l.b16 %v332
        %v388 = vunpack.c.l.b16 %v333
        %v389 = vunpack.c.l.b16 %v334
        %v390 = vunpack.c.l.b16 %v335
        %v391 = vunpack.c.l.b16 %v336
        %v392 = vunpack.c.l.b16 %v337
        %v393 = vunpack.c.l.b16 %v338
        %v394 = vunpack.c.l.b16 %v339
        %v395 = vpack.c.b16 %v380, %v379
        %v396 = vpack.c.b16 %v382, %v381
        %v397 = vpack.c.b16 %v384, %v383
        %v398 = vpack.c.b16 %v386, %v385
        %v399 = vpack.c.b16 %v388, %v387
        %v400 = vpack.c.b16 %v390, %v389
        %v401 = vpack.c.b16 %v392, %v391
        %v402 = vpack.c.b16 %v394, %v393
        %411 = vmatprep.subr.bf16.mxu0 0
        %412 = vmatpush1.bf16.msra.mxu0 %v402
        %413 = vmatprep.subr.bf16.mxu0 0
        %414 = vmatpush1.bf16.msra.mxu0 %v401
        %415 = vmatprep.subr.bf16.mxu0 0
        %416 = vmatpush1.bf16.msra.mxu0 %v400
        %417 = vmatprep.subr.bf16.mxu0 0
        %418 = vmatpush1.bf16.msra.mxu0 %v399
        %419 = vmatprep.subr.bf16.mxu0 0
        %420 = vmatpush1.bf16.msra.mxu0 %v398
        %421 = vmatprep.subr.bf16.mxu0 0
        %422 = vmatpush1.bf16.msra.mxu0 %v397
        %423 = vmatprep.subr.bf16.mxu0 0
        %424 = vmatpush1.bf16.msra.mxu0 %v396
        %425 = vmatprep.subr.bf16.mxu0 0
        %426 = vmatpush1.bf16.msra.mxu0 %v395
        %427 = vmatprep.subr.bf16.mxu0 0
        %428 = vmatpush2.bf16.msra.mxu0 0
        %429 = vmatprep.subr.bf16.mxu0 0
        %430 = vmatpush2.bf16.msra.mxu0 0
        %431 = vmatprep.subr.bf16.mxu0 0
        %432 = vmatpush2.bf16.msra.mxu0 0
        %433 = vmatprep.subr.bf16.mxu0 0
        %434 = vmatpush2.bf16.msra.mxu0 0
        %435 = vmatprep.subr.bf16.mxu0 0
        %436 = vmatpush2.bf16.msra.mxu0 0
        %437 = vmatprep.subr.bf16.mxu0 0
        %438 = vmatpush2.bf16.msra.mxu0 0
        %439 = vmatprep.subr.bf16.mxu0 0
        %440 = vmatpush2.bf16.msra.mxu0 0
        %441 = vmatprep.subr.bf16.mxu0 0
        %442 = vmatpush2.bf16.msra.mxu0 0
        %443 = vmatprep.mubr.bf16.mxu0 0
        %444 = vmatmul.mubr.bf16.gmra.mxu0 %v323
        %v445 = vpop.f32.mrf.mxu0
        %v446 = vadd.f32 %v361, %v445
        %v447 = vpop.f32.mrf.mxu0
        %v448 = vpop.f32.mrf.mxu0
        %v449 = vpop.f32.mrf.mxu0
        %450 = vdwg.mxu0
        %451 = vmax.xlane.f32.xlu0 %v446
        %v452 = vpop.xlane.xlu0 %451
        %v453 = vsub.f32 %v446, %v452
        %v454 = vmul.f32 %v453, 1.442695
        %v455 = vpow.pop %v454
        %456 = vadd.xlane.f32.xlu0 %v455
        %v457 = vpop.xlane.xlu0 %456
        %v458 = vpack.c.bf16 %v455, %v455
        %v475 = vunpack.c.l.b16 %v340
        %v476 = vunpack.c.l.b16 %v341
        %v477 = vunpack.c.l.b16 %v342
        %v478 = vunpack.c.l.b16 %v343
        %v479 = vunpack.c.l.b16 %v344
        %v480 = vunpack.c.l.b16 %v345
        %v481 = vunpack.c.l.b16 %v346
        %v482 = vunpack.c.l.b16 %v347
        %v483 = vunpack.c.l.b16 %v348
        %v484 = vunpack.c.l.b16 %v349
        %v485 = vunpack.c.l.b16 %v350
        %v486 = vunpack.c.l.b16 %v351
        %v487 = vunpack.c.l.b16 %v352
        %v488 = vunpack.c.l.b16 %v353
        %v489 = vunpack.c.l.b16 %v354
        %v490 = vunpack.c.l.b16 %v355
        %v491 = vpack.c.b16 %v476, %v475
        %v492 = vpack.c.b16 %v478, %v477
        %v493 = vpack.c.b16 %v480, %v479
        %v494 = vpack.c.b16 %v482, %v481
        %v495 = vpack.c.b16 %v484, %v483
        %v496 = vpack.c.b16 %v486, %v485
        %v497 = vpack.c.b16 %v488, %v487
        %v498 = vpack.c.b16 %v490, %v489
        %507 = vmatprep.subr.bf16.mxu0 0
        %508 = vmatpush1.bf16.msra.mxu0 %v498
        %509 = vmatprep.subr.bf16.mxu0 0
        %510 = vmatpush1.bf16.msra.mxu0 %v497
        %511 = vmatprep.subr.bf16.mxu0 0
        %512 = vmatpush1.bf16.msra.mxu0 %v496
        %513 = vmatprep.subr.bf16.mxu0 0
        %514 = vmatpush1.bf16.msra.mxu0 %v495
        %515 = vmatprep.subr.bf16.mxu0 0
        %516 = vmatpush1.bf16.msra.mxu0 %v494
        %517 = vmatprep.subr.bf16.mxu0 0
        %518 = vmatpush1.bf16.msra.mxu0 %v493
        %519 = vmatprep.subr.bf16.mxu0 0
        %520 = vmatpush1.bf16.msra.mxu0 %v492
        %521 = vmatprep.subr.bf16.mxu0 0
        %522 = vmatpush1.bf16.msra.mxu0 %v491
        %523 = vmatprep.subr.bf16.mxu0 0
        %524 = vmatpush2.bf16.msra.mxu0 0
        %525 = vmatprep.subr.bf16.mxu0 0
        %526 = vmatpush2.bf16.msra.mxu0 0
        %527 = vmatprep.subr.bf16.mxu0 0
        %528 = vmatpush2.bf16.msra.mxu0 0
        %529 = vmatprep.subr.bf16.mxu0 0
        %530 = vmatpush2.bf16.msra.mxu0 0
        %531 = vmatprep.subr.bf16.mxu0 0
        %532 = vmatpush2.bf16.msra.mxu0 0
        %533 = vmatprep.subr.bf16.mxu0 0
        %534 = vmatpush2.bf16.msra.mxu0 0
        %535 = vmatprep.subr.bf16.mxu0 0
        %536 = vmatpush2.bf16.msra.mxu0 0
        %537 = vmatprep.subr.bf16.mxu0 0
        %538 = vmatpush2.bf16.msra.mxu0 0
        %539 = vmatprep.mubr.bf16.mxu0 0
        %540 = vmatmul.mubr.bf16.gmra.mxu0 %v458
        %v541 = vpop.f32.mrf.mxu0
        %v542 = vadd.f32 0.0, %v541
        %v543 = vpop.f32.mrf.mxu0
        %v544 = vpop.f32.mrf.mxu0
        %v545 = vpop.f32.mrf.mxu0
        %546 = vdwg.mxu0
        %v547 = vrcp.pop %v457
        %v548 = vmul.f32 %v542, %v547
        %v549 = vpack.c.bf16 %v548, %v548
        %550 = vst [vmem:[%s318] sm:$0xf] %v549
        %s551 = sand.u32 %s152, 1
        %s552 = scalar_lea.sflag [#allocation4], %s551
        %s553 = sand.u32 %s152, 1
        %s554 = smul.addr %s553, 4
        %s555 = scalar_lea.vmem [#allocation8], %s554
        // Predicated region
        $region49: #{tpu_custom_call.1} parent=35 // pred_check
          %p556 = pneg %p162
        $region50: #{tpu_custom_call.1} parent=35 // pred_check_branch
          %558 = sbr.rel (%p556) target = $region52
        $region51: #{tpu_custom_call.1} parent=35 // pred_region
          %s560 = ssub.s32 64, 64
          %561 = vsyncadd %s552, %s560
          %s562 = smul.addr %s28, 2
          %s563 = sadd.s32 %s29, %s562
          %s564 = smul.addr %s563, 64
          %s565 = scalar_lea.hbm %s4, %s564
          %s567 = sshll.u32 %s555, 4
          %s568 = int_to_ptr.vmem [resolvable:$true] %s567
          %570 = dma.vmem_to_hbm [thread:$0]  %s568, 64, %s565, %s552
        $region52: #{tpu_custom_call.1} parent=35 // pred_fallthru
          _
      $region36: #{tpu_custom_call.1} parent=5 // pred_fallthru
        _
      %p571 = scmp.le.s32.totalorder 2, %s19
      // Predicated region
      $region53: #{tpu_custom_call.1} parent=5 // pred_check
        %p572 = pneg %p571
      $region54: #{tpu_custom_call.1} parent=5 // pred_check_branch
        %574 = sbr.rel (%p572) target = $region56
      $region55: #{tpu_custom_call.1} parent=5 // pred_region
        %s575 = ssub.s32 %s19, 2
        // Predicated region
        $region57: #{tpu_custom_call.1} parent=55 // pred_check
          %p576 = pneg %p168
        $region58: #{tpu_custom_call.1} parent=55 // pred_check_branch
          %578 = sbr.rel (%p576) target = $region60
        $region59: #{tpu_custom_call.1} parent=55 // pred_region
          %s579 = sand.u32 %s153, 1
          %s580 = scalar_lea.sflag [#allocation4], %s579
          %s581 = sand.u32 %s153, 1
          %s582 = smul.addr %s581, 4
          %s583 = scalar_lea.vmem [#allocation8], %s582
          %584 = dma.done %s580, 64
        $region60: #{tpu_custom_call.1} parent=55 // pred_fallthru
          _
      $region56: #{tpu_custom_call.1} parent=5 // pred_fallthru
        _
    $region6: #{tpu_custom_call.1} parent=1 // loop_footer
      %s23 = sadd.s32 1, %s19
    $region7: #{tpu_custom_call.1} parent=1 // loop_footer_branch
      %18 = sbr.rel target = $region3
    $region8: #{tpu_custom_call.1} parent=1 // loop_exit
      _
    %585 = vsyncpa [#allocation3], 1
    %s586 = scalar_lea.sflag [#allocation3], 1
    %587 = vsyncpa %s586, 1
    %588 = vsyncpa [#allocation6], 1
    %s589 = scalar_lea.sflag [#allocation6], 1
    %590 = vsyncpa %s589, 1
    %591 = vsyncpa [#allocation4], 1
    %s592 = scalar_lea.sflag [#allocation4], 1
    %593 = vsyncpa %s592, 1

</llo_original>
